<compile_context>
chip_gen: v7x
topology: tpu7x:2x2x1
jax: 0.10.0
libtpu: 0.0.40
codegen_flags: <defaults>
</compile_context>

<pallas_src>
import functools

import jax
import jax.numpy as jnp
from jax.experimental import pallas as pl
from jax.experimental.pallas import tpu as pltpu


def _round_up(x, m):
    return (x + m - 1) // m * m


# ---------------------------------------------------------------------------
# Stage 1: batched input projection  gi = emb[tokens] @ W_ih + b_ih
# ---------------------------------------------------------------------------
def _input_proj_kernel(x_ref,      # (T_CHUNK, Hp)   bf16 gathered embedding rows
                       wih_ref,    # (Hp, 3*Hp)      bf16 (VMEM resident)
                       bih_ref,    # (1, 3*Hp)       f32
                       gi_ref):    # (T_CHUNK, 3*Hp) f32
    gi_ref[...] = (jnp.dot(x_ref[...], wih_ref[...],
                           preferred_element_type=jnp.float32)
                   + bih_ref[...])


# ---------------------------------------------------------------------------
# Stage 2: sequential GRU recurrence over the precomputed gi rows
# ---------------------------------------------------------------------------
def _gru_recurrence_kernel(gi_ref,     # (T_CHUNK, 3*Hp) f32
                           h0_ref,     # (1, Hp) f32
                           whh_ref,    # (Hp, 3*Hp) bf16 (VMEM resident)
                           bhh_ref,    # (1, 3*Hp) f32
                           out_ref,    # (T_CHUNK, Hp) f32
                           h_scratch,  # VMEM (1, Hp) f32 carried hidden
                           *, seq_len, t_chunk):
    Hp = h_scratch.shape[1]
    c = pl.program_id(0)

    @pl.when(c == 0)
    def _():
        h_scratch[...] = h0_ref[...]

    def step(i, h):
        gi = gi_ref[pl.ds(i, 1), :]                        # (1, 3*Hp) f32
        gh = jnp.dot(h.astype(whh_ref.dtype), whh_ref[...],
                     preferred_element_type=jnp.float32) + bhh_ref[...]
        # PyTorch GRU gate order [r | z | n]; each slice is 128-lane aligned.
        r = jax.nn.sigmoid(gi[:, 0:Hp] + gh[:, 0:Hp])
        z = jax.nn.sigmoid(gi[:, Hp:2 * Hp] + gh[:, Hp:2 * Hp])
        n = jnp.tanh(gi[:, 2 * Hp:3 * Hp] + r * gh[:, 2 * Hp:3 * Hp])
        h_new = (1.0 - z) * n + z * h
        out_ref[pl.ds(i, 1), :] = h_new                    # row into VMEM block
        # Padded timesteps (t >= seq_len) must not corrupt the carried state.
        valid = (c * t_chunk + i) < seq_len
        return jnp.where(valid, h_new, h)

    h_final = jax.lax.fori_loop(0, t_chunk, step, h_scratch[...])
    h_scratch[...] = h_final


# ---------------------------------------------------------------------------
# Parameter packing
# ---------------------------------------------------------------------------
def pack_params(params, hidden_size):
    """Pad to a 128-lane-aligned per-gate layout; cast big matrices to bf16."""
    H = hidden_size
    Hp = _round_up(H, 128)
    emb = params["embedding"]                              # (V, H) f32
    emb_p = jnp.pad(emb, ((0, 0), (0, Hp - H))).astype(jnp.bfloat16)

    def pad_gate_matrix(w):                                # (H, 3H) -> (Hp, 3Hp)
        w3 = w.reshape(H, 3, H)
        w3 = jnp.pad(w3, ((0, Hp - H), (0, 0), (0, Hp - H)))
        return w3.reshape(Hp, 3 * Hp).astype(jnp.bfloat16)

    def pad_gate_bias(b):                                  # (1, 3H) -> (1, 3Hp)
        b3 = b.reshape(3, H)
        b3 = jnp.pad(b3, ((0, 0), (0, Hp - H)))
        return b3.reshape(1, 3 * Hp).astype(jnp.float32)

    return {
        "H": H, "Hp": Hp,
        "emb": emb_p,                                      # (V, Hp) bf16
        "w_ih": pad_gate_matrix(params["w_ih_t"]),
        "w_hh": pad_gate_matrix(params["w_hh_t"]),
        "b_ih": pad_gate_bias(params["b_ih"]),
        "b_hh": pad_gate_bias(params["b_hh"]),
    }


def _vmem_limit(nbytes):
    # Derived from actual (double-buffered) buffer sizes with 50% headroom;
    # clamp to [4 MiB, 64 MiB] so it stays valid down to v7x physical VMEM.
    return int(min(64 * 1024 * 1024, max(4 * 1024 * 1024, 1.5 * nbytes)))


# ---------------------------------------------------------------------------
# Forward
# ---------------------------------------------------------------------------
def encoder_rnn_forward(tokens, hidden, packed):
    """Encode a token sequence.

    tokens: (T,) int32; hidden: (1, 1, H) f32 (initHidden()).
    Returns (outputs (T, 1, H), hidden (1, 1, H)) -- identical to calling
    EncoderRNN.forward once per token and stacking the outputs.
    """
    H, Hp = packed["H"], packed["Hp"]
    T = int(tokens.shape[0])

    # >=8 sublanes per chunk; cap at 128 rows so large-T compiles stay small.
    T_CHUNK = min(128, _round_up(T, 8))
    T_pad = _round_up(T, T_CHUNK)
    n_chunks = T_pad // T_CHUNK

    # TODO(synk): the data-dependent embedding row gather stays in XLA
    # (jnp.take); a Pallas version would need one manual DMA per row, which is
    # exactly the per-step overhead the two-stage design removes.
    tok_pad = jnp.pad(tokens.astype(jnp.int32), (0, T_pad - T))
    x = jnp.take(packed["emb"], tok_pad, axis=0)           # (T_pad, Hp) bf16

    # ---- Stage 1: gi = x @ W_ih + b_ih for all timesteps (full MXU tiles) --
    bytes1 = 2 * (T_CHUNK * Hp * 2 + Hp * 3 * Hp * 2 + 3 * Hp * 4
                  + T_CHUNK * 3 * Hp * 4)
    gi = pl.pallas_call(
        _input_proj_kernel,
        out_shape=jax.ShapeDtypeStruct((T_pad, 3 * Hp), jnp.float32),
        grid_spec=pltpu.PrefetchScalarGridSpec(
            num_scalar_prefetch=0,
            grid=(n_chunks,),
            in_specs=[
                pl.BlockSpec((T_CHUNK, Hp), lambda m: (m, 0)),
                pl.BlockSpec((Hp, 3 * Hp), lambda m: (0, 0)),   # W_ih resident
                pl.BlockSpec((1, 3 * Hp), lambda m: (0, 0)),
            ],
            out_specs=pl.BlockSpec((T_CHUNK, 3 * Hp), lambda m: (m, 0)),
        ),
        compiler_params=pltpu.CompilerParams(
            dimension_semantics=("parallel",),       # rows are independent
            vmem_limit_bytes=_vmem_limit(bytes1),
        ),
    )(x, packed["w_ih"], packed["b_ih"])

    # ---- Stage 2: chunked sequential GRU recurrence -------------------------
    h0 = jnp.pad(hidden.reshape(1, H).astype(jnp.float32),
                 ((0, 0), (0, Hp - H)))
    bytes2 = 2 * (T_CHUNK * 3 * Hp * 4 + Hp * 4 + Hp * 3 * Hp * 2
                  + 3 * Hp * 4 + T_CHUNK * Hp * 4) + Hp * 4
    kernel = functools.partial(_gru_recurrence_kernel,
                               seq_len=T, t_chunk=T_CHUNK)
    outs = pl.pallas_call(
        kernel,
        out_shape=jax.ShapeDtypeStruct((T_pad, Hp), jnp.float32),
        grid_spec=pltpu.PrefetchScalarGridSpec(
            num_scalar_prefetch=0,
            grid=(n_chunks,),
            in_specs=[
                pl.BlockSpec((T_CHUNK, 3 * Hp), lambda c: (c, 0)),
                pl.BlockSpec((1, Hp), lambda c: (0, 0)),        # h0 (t==0 only)
                pl.BlockSpec((Hp, 3 * Hp), lambda c: (0, 0)),   # W_hh resident
                pl.BlockSpec((1, 3 * Hp), lambda c: (0, 0)),
            ],
            out_specs=pl.BlockSpec((T_CHUNK, Hp), lambda c: (c, 0)),
            scratch_shapes=[pltpu.VMEM((1, Hp), jnp.float32)],
        ),
        compiler_params=pltpu.CompilerParams(
            dimension_semantics=("arbitrary",),      # sequential recurrence
            vmem_limit_bytes=_vmem_limit(bytes2),
        ),
    )(gi, h0, packed["w_hh"], packed["b_hh"])

    outputs = outs[:T, :H].reshape(T, 1, H)          # strip time/lane padding
    hidden_out = outputs[T - 1:T]                    # single-layer GRU: last row
    return outputs, hidden_out


def encoder_rnn_step(token, hidden, packed):
    """Single-token forward, exactly matching EncoderRNN.forward."""
    return encoder_rnn_forward(token.reshape(1), hidden, packed)


# ---------------------------------------------------------------------------
# Pure-JAX reference (nn.Embedding + nn.GRU step loop), using the same
# bf16-rounded weights the kernel sees, with f32 math.
# ---------------------------------------------------------------------------
def _reference_seq(tokens, hidden, params):
    H = hidden.shape[-1]
    emb = params["embedding"].astype(jnp.bfloat16).astype(jnp.float32)
    wih = params["w_ih_t"].astype(jnp.bfloat16).astype(jnp.float32)
    whh = params["w_hh_t"].astype(jnp.bfloat16).astype(jnp.float32)
    bih = params["b_ih"].reshape(1, 3 * H)
    bhh = params["b_hh"].reshape(1, 3 * H)
    h = hidden.reshape(1, H).astype(jnp.float32)
    outs = []
    for t in range(int(tokens.shape[0])):
        x = emb[tokens[t]].reshape(1, H)
        hc = h.astype(jnp.bfloat16).astype(jnp.float32)
        gi = x @ wih + bih
        gh = hc @ whh + bhh
        r = jax.nn.sigmoid(gi[:, 0:H] + gh[:, 0:H])
        z = jax.nn.sigmoid(gi[:, H:2 * H] + gh[:, H:2 * H])
        n = jnp.tanh(gi[:, 2 * H:3 * H] + r * gh[:, 2 * H:3 * H])
        h = (1.0 - z) * n + z * h
        outs.append(h)
    outputs = jnp.stack(outs, axis=0)                # (T, 1, H)
    return outputs, h.reshape(1, 1, H)


def init_params(key, input_size, hidden_size):
    k_emb, k_wih, k_whh, k_bih, k_bhh = jax.random.split(key, 5)
    scale = 1.0 / jnp.sqrt(hidden_size)
    return {
        # nn.Embedding(input_size, hidden_size) -> (V, H)
        "embedding": jax.random.normal(k_emb, (input_size, hidden_size),
                                       jnp.float32),
        # nn.GRU weight_ih_l0 is (3H, H); stored transposed (H, 3H), gates [r|z|n]
        "w_ih_t": jax.random.uniform(k_wih, (hidden_size, 3 * hidden_size),
                                     jnp.float32, -scale, scale),
        "w_hh_t": jax.random.uniform(k_whh, (hidden_size, 3 * hidden_size),
                                     jnp.float32, -scale, scale),
        "b_ih": jax.random.uniform(k_bih, (1, 3 * hidden_size),
                                   jnp.float32, -scale, scale),
        "b_hh": jax.random.uniform(k_bhh, (1, 3 * hidden_size),
                                   jnp.float32, -scale, scale),
    }


if __name__ == "__main__":
    INPUT_SIZE = 16      # vocab size
    HIDDEN_SIZE = 32
    SEQ_LEN = 8

    key = jax.random.PRNGKey(0)
    params = init_params(key, INPUT_SIZE, HIDDEN_SIZE)
    packed = pack_params(params, HIDDEN_SIZE)

    tok_key = jax.random.fold_in(key, 123)
    tokens = jax.random.randint(tok_key, (SEQ_LEN,), 0, INPUT_SIZE, jnp.int32)
    hidden0 = jnp.zeros((1, 1, HIDDEN_SIZE), jnp.float32)     # initHidden()

    # Whole-sequence encode: input projection batched, recurrence chunked.
    outputs, h_final = encoder_rnn_forward(tokens, hidden0, packed)
    outputs = jax.block_until_ready(outputs)
    h_final = jax.block_until_ready(h_final)

    ref_out, ref_h = _reference_seq(tokens, hidden0, params)
    assert outputs.shape == (SEQ_LEN, 1, HIDDEN_SIZE)
    assert h_final.shape == (1, 1, HIDDEN_SIZE)
    assert jnp.allclose(outputs, ref_out, atol=1e-3, rtol=1e-3)
    assert jnp.allclose(h_final, ref_h, atol=1e-3, rtol=1e-3)

    # Single-token call (the literal EncoderRNN.forward signature).
    out1, h1 = encoder_rnn_step(tokens[:1], hidden0, packed)
    out1 = jax.block_until_ready(out1)
    h1 = jax.block_until_ready(h1)
    ref_out1, ref_h1 = _reference_seq(tokens[:1], hidden0, params)
    assert out1.shape == (1, 1, HIDDEN_SIZE) and h1.shape == (1, 1, HIDDEN_SIZE)
    assert jnp.allclose(out1, ref_out1, atol=1e-3, rtol=1e-3)
    assert jnp.allclose(h1, ref_h1, atol=1e-3, rtol=1e-3)

    print("KERNEL_OK")
</pallas_src>

<mosaic_0001>
module attributes {stable_mosaic.version = 11 : i64} {
  func.func @_input_proj_kernel(%arg0: i32, %arg1: memref<8x128xbf16, #tpu.memory_space<vmem>>, %arg2: memref<128x384xbf16, #tpu.memory_space<vmem>>, %arg3: memref<1x384xf32, #tpu.memory_space<vmem>>, %arg4: memref<8x384xf32, #tpu.memory_space<vmem>>) attributes {dimension_semantics = [#tpu.dimension_semantics<parallel>], iteration_bounds = array<i64: 1>, scalar_prefetch = 0 : i64, scratch_operands = 0 : i64, tpu.core_type = #tpu.core_type<tc>, window_params = [{transform_indices = @transform_0, window_bounds = array<i64: 8, 128>}, {pipeline_mode = #tpu.pipeline_mode<synchronous>, transform_indices = @transform_1, window_bounds = array<i64: 128, 384>}, {pipeline_mode = #tpu.pipeline_mode<synchronous>, transform_indices = @transform_2, window_bounds = array<i64: 1, 384>}, {transform_indices = @transform_3, window_bounds = array<i64: 8, 384>}]} {
    %c0 = arith.constant 0 : index
    %c0_0 = arith.constant 0 : index
    %0 = vector.load %arg1[%c0, %c0_0] : memref<8x128xbf16, #tpu.memory_space<vmem>>, vector<8x128xbf16>
    %c0_1 = arith.constant 0 : index
    %c0_2 = arith.constant 0 : index
    %1 = vector.load %arg2[%c0_1, %c0_2] : memref<128x384xbf16, #tpu.memory_space<vmem>>, vector<128x384xbf16>
    %cst = arith.constant dense<0.000000e+00> : vector<8x384xf32>
    %2 = tpu.matmul %0, %1, %cst {dimension_numbers = #tpu.dot_dimension_numbers<[1], [0], [0], [1], [0, 0, 1, 1], [], []>} : vector<8x128xbf16>, vector<128x384xbf16>, vector<8x384xf32> -> vector<8x384xf32>
    %c0_3 = arith.constant 0 : index
    %c0_4 = arith.constant 0 : index
    %3 = vector.load %arg3[%c0_3, %c0_4] : memref<1x384xf32, #tpu.memory_space<vmem>>, vector<1x384xf32>
    %4 = vector.broadcast %3 : vector<1x384xf32> to vector<8x384xf32>
    %5 = arith.addf %2, %4 : vector<8x384xf32>
    %c0_5 = arith.constant 0 : index
    %c0_6 = arith.constant 0 : index
    %6 = vector.load %arg4[%c0_5, %c0_6] : memref<8x384xf32, #tpu.memory_space<vmem>>, vector<8x384xf32>
    tpu.vector_store %arg4[%c0_5, %c0_6], %5 {strides = array<i32>} : memref<8x384xf32, #tpu.memory_space<vmem>>, vector<8x384xf32>,
    return
  }
  func.func @transform_0(%arg0: i32) -> (i32, i32) {
    %c0_i32 = arith.constant 0 : i32
    %c0_i32_0 = arith.constant 0 : i32
    return %arg0, %c0_i32 : i32, i32
  }
  func.func @transform_1(%arg0: i32) -> (i32, i32) {
    %c0_i32 = arith.constant 0 : i32
    %c0_i32_0 = arith.constant 0 : i32
    %c0_i32_1 = arith.constant 0 : i32
    return %c0_i32, %c0_i32_0 : i32, i32
  }
  func.func @transform_2(%arg0: i32) -> (i32, i32) {
    %c0_i32 = arith.constant 0 : i32
    %c0_i32_0 = arith.constant 0 : i32
    %c0_i32_1 = arith.constant 0 : i32
    return %c0_i32, %c0_i32_0 : i32, i32
  }
  func.func @transform_3(%arg0: i32) -> (i32, i32) {
    %c0_i32 = arith.constant 0 : i32
    %c0_i32_0 = arith.constant 0 : i32
    return %arg0, %c0_i32 : i32, i32
  }
}

</mosaic_0001>

<llo_original>
// kernel: tpu_custom_call.1
$region0: #{tpu_custom_call.1}
  #allocation0 [shape = 'u32[]', space=smem, size = 0x4, offset = 0x4, fixed_abs, tag = 'smem constant byte address 0x4 - core index']
  #allocation1 [shape = 'u32[144,128]{1,0:T(1,128)}', space=vmem, size = 0x12000, scoped, tag = 'internal scratch']
  %s0 = inlined_call_operand.hbm [shape: bf16[8,128], index: 0, kind: input, shape index: {}]
  %s1 = inlined_call_operand.hbm [shape: bf16[128,384], index: 1, kind: input, shape index: {}]
  %s2 = inlined_call_operand.vmem [shape: f32[1,384], index: 2, kind: input, shape index: {}]
  %s3 = inlined_call_operand.hbm [shape: f32[8,384], index: 3, kind: output, shape index: {}]
  %s4 = sld [smem:[#allocation0]]
  $region30: #{tpu_custom_call.1} parent=0
    _
  %s6 = ssub.s32 1, %s4
  %s7 = scalar_select 0, %s6, %s4
  $region1: #{tpu_custom_call.1} parent=0
    #allocation2 [shape = 'u8[2048]{0}', space=vmem, size = 0x800, scoped, tag = 'input window, operand 0, single buffered']
    #allocation3 [shape = 's32[1]{0}', space=sflag, size = 0x4, scoped, tag = 'scoped memory for tpu_custom_call.1']
    #allocation4 [shape = 's32[1]{0}', space=sflag, size = 0x4, scoped, tag = 'scoped memory for tpu_custom_call.1']
    #allocation5 [shape = 'u8[98304]{0}', space=vmem, size = 0x18000, scoped, tag = 'input window, operand 1, single buffered']
    #allocation6 [shape = 's32[1]{0}', space=sflag, size = 0x4, scoped, tag = 'scoped memory for tpu_custom_call.1']
    #allocation7 [shape = 'u8[12288]{0}', space=vmem, size = 0x3000, scoped, tag = 'output window, operand 0, single buffered']
    %8 = vsyncpa [#allocation3], 0
    %9 = vsyncpa [#allocation6], 0
    %10 = vsyncpa [#allocation4], 0
    // Predicated region
    $region2: #{tpu_custom_call.1} parent=1 // pred_check
      _
    $region3: #{tpu_custom_call.1} parent=1 // pred_check_branch
      %12 = sbr.rel (0) target = $region5
    $region4: #{tpu_custom_call.1} parent=1 // pred_region
      %s14 = ssub.s32 64, 64
      %15 = vsyncadd [#allocation3], %s14
      %s17 = sshll.u32 [#allocation2], 4
      %s18 = int_to_ptr.vmem [resolvable:$true] %s17
      %20 = dma.hbm_to_vmem [thread:$0]  %s0, 64, %s18, [#allocation3]
    $region5: #{tpu_custom_call.1} parent=1 // pred_fallthru
      _
    // Predicated region
    $region6: #{tpu_custom_call.1} parent=1 // pred_check
      _
    $region7: #{tpu_custom_call.1} parent=1 // pred_check_branch
      %22 = sbr.rel (0) target = $region9
    $region8: #{tpu_custom_call.1} parent=1 // pred_region
      %s24 = ssub.s32 3072, 3072
      %25 = vsyncadd [#allocation6], %s24
      %s26 = sshll.u32 [#allocation5], 4
      %s27 = int_to_ptr.vmem [resolvable:$true] %s26
      %32 = dma.hbm_to_vmem [thread:$0]  %s1, 3072, %s27, [#allocation6], 192, 192, 12
    $region9: #{tpu_custom_call.1} parent=1 // pred_fallthru
      _
    // Predicated region
    $region10: #{tpu_custom_call.1} parent=1 // pred_check
      _
    $region11: #{tpu_custom_call.1} parent=1 // pred_check_branch
      %34 = sbr.rel (0) target = $region13
    $region12: #{tpu_custom_call.1} parent=1 // pred_region
      _
    $region13: #{tpu_custom_call.1} parent=1 // pred_fallthru
      _
    // Predicated region
    $region14: #{tpu_custom_call.1} parent=1 // pred_check
      _
    $region15: #{tpu_custom_call.1} parent=1 // pred_check_branch
      %36 = sbr.rel (0) target = $region17
    $region16: #{tpu_custom_call.1} parent=1 // pred_region
      %37 = dma.done [#allocation3], 64
    $region17: #{tpu_custom_call.1} parent=1 // pred_fallthru
      _
    // Predicated region
    $region18: #{tpu_custom_call.1} parent=1 // pred_check
      _
    $region19: #{tpu_custom_call.1} parent=1 // pred_check_branch
      %39 = sbr.rel (0) target = $region21
    $region20: #{tpu_custom_call.1} parent=1 // pred_region
      %40 = dma.done [#allocation6], 3072
    $region21: #{tpu_custom_call.1} parent=1 // pred_fallthru
      _
    %v42 = vld [vmem:[#allocation2] sm:$0xf]
    %v43 = vld [vmem:[#allocation5] sm:$0xff]
    %v44 = vld [vmem:[#allocation5 + $0x8] sm:$0xf]
    %v45 = vld [vmem:[#allocation5 + $0xc] sm:$0xff]
    %v46 = vld [vmem:[#allocation5 + $0x14] sm:$0xf]
    %v47 = vld [vmem:[#allocation5 + $0x18] sm:$0xff]
    %v48 = vld [vmem:[#allocation5 + $0x20] sm:$0xf]
    %v49 = vld [vmem:[#allocation5 + $0x24] sm:$0xff]
    %v50 = vld [vmem:[#allocation5 + $0x2c] sm:$0xf]
    %v51 = vld [vmem:[#allocation5 + $0x30] sm:$0xff]
    %v52 = vld [vmem:[#allocation5 + $0x38] sm:$0xf]
    %v53 = vld [vmem:[#allocation5 + $0x3c] sm:$0xff]
    %v54 = vld [vmem:[#allocation5 + $0x44] sm:$0xf]
    %v55 = vld [vmem:[#allocation5 + $0x48] sm:$0xff]
    %v56 = vld [vmem:[#allocation5 + $0x50] sm:$0xf]
    %v57 = vld [vmem:[#allocation5 + $0x54] sm:$0xff]
    %v58 = vld [vmem:[#allocation5 + $0x5c] sm:$0xf]
    %v59 = vld [vmem:[#allocation5 + $0x60] sm:$0xff]
    %v60 = vld [vmem:[#allocation5 + $0x68] sm:$0xf]
    %v61 = vld [vmem:[#allocation5 + $0x6c] sm:$0xff]
    %v62 = vld [vmem:[#allocation5 + $0x74] sm:$0xf]
    %v63 = vld [vmem:[#allocation5 + $0x78] sm:$0xff]
    %v64 = vld [vmem:[#allocation5 + $0x80] sm:$0xf]
    %v65 = vld [vmem:[#allocation5 + $0x84] sm:$0xff]
    %v66 = vld [vmem:[#allocation5 + $0x8c] sm:$0xf]
    %v67 = vld [vmem:[#allocation5 + $0x90] sm:$0xff]
    %v68 = vld [vmem:[#allocation5 + $0x98] sm:$0xf]
    %v69 = vld [vmem:[#allocation5 + $0x9c] sm:$0xff]
    %v70 = vld [vmem:[#allocation5 + $0xa4] sm:$0xf]
    %v71 = vld [vmem:[#allocation5 + $0xa8] sm:$0xff]
    %v72 = vld [vmem:[#allocation5 + $0xb0] sm:$0xf]
    %v73 = vld [vmem:[#allocation5 + $0xb4] sm:$0xff]
    %v74 = vld [vmem:[#allocation5 + $0xbc] sm:$0xf]
    %v75 = vld [vmem:[%s2] sm:$0x7]
    %v77 = vlaneseq
    %v78 = vshrl.u32 %v77, 7
    %v79 = vsub.s32 0, %v78
    %v80 = vrot.slane %v75, %v79
    %v81 = vlaneseq
    %v82 = vshrl.u32 %v81, 7
    %v83 = vsub.s32 1, %v82
    %v84 = vrot.slane %v75, %v83
    %v85 = vlaneseq
    %v86 = vshrl.u32 %v85, 7
    %v87 = vsub.s32 2, %v86
    %v88 = vrot.slane %v75, %v87
    %v124 = vunpack.c.l.b16 %v43
    %v125 = vunpack.c.h.b16 %v43
    %v126 = vunpack.c.l.b16 %v44
    %v127 = vunpack.c.l.b16 %v45
    %v128 = vunpack.c.h.b16 %v45
    %v129 = vunpack.c.l.b16 %v46
    %v130 = vunpack.c.l.b16 %v47
    %v131 = vunpack.c.h.b16 %v47
    %v132 = vunpack.c.l.b16 %v48
    %v133 = vunpack.c.l.b16 %v49
    %v134 = vunpack.c.h.b16 %v49
    %v135 = vunpack.c.l.b16 %v50
    %v136 = vunpack.c.l.b16 %v51
    %v137 = vunpack.c.h.b16 %v51
    %v138 = vunpack.c.l.b16 %v52
    %v139 = vunpack.c.l.b16 %v53
    %v140 = vunpack.c.h.b16 %v53
    %v141 = vunpack.c.l.b16 %v54
    %v142 = vunpack.c.l.b16 %v55
    %v143 = vunpack.c.h.b16 %v55
    %v144 = vunpack.c.l.b16 %v56
    %v145 = vunpack.c.l.b16 %v57
    %v146 = vunpack.c.h.b16 %v57
    %v147 = vunpack.c.l.b16 %v58
    %v148 = vunpack.c.l.b16 %v59
    %v149 = vunpack.c.h.b16 %v59
    %v150 = vunpack.c.l.b16 %v60
    %v151 = vunpack.c.l.b16 %v61
    %v152 = vunpack.c.h.b16 %v61
    %v153 = vunpack.c.l.b16 %v62
    %v154 = vunpack.c.l.b16 %v63
    %v155 = vunpack.c.h.b16 %v63
    %v156 = vunpack.c.l.b16 %v64
    %v157 = vunpack.c.l.b16 %v65
    %v158 = vunpack.c.h.b16 %v65
    %v159 = vunpack.c.l.b16 %v66
    %v160 = vunpack.c.l.b16 %v67
    %v161 = vunpack.c.h.b16 %v67
    %v162 = vunpack.c.l.b16 %v68
    %v163 = vunpack.c.l.b16 %v69
    %v164 = vunpack.c.h.b16 %v69
    %v165 = vunpack.c.l.b16 %v70
    %v166 = vunpack.c.l.b16 %v71
    %v167 = vunpack.c.h.b16 %v71
    %v168 = vunpack.c.l.b16 %v72
    %v169 = vunpack.c.l.b16 %v73
    %v170 = vunpack.c.h.b16 %v73
    %v171 = vunpack.c.l.b16 %v74
    %v172 = vpack.c.b16 %v127, %v124
    %v173 = vpack.c.b16 %v128, %v125
    %v174 = vpack.c.b16 %v129, %v126
    %v175 = vpack.c.b16 %v133, %v130
    %v176 = vpack.c.b16 %v134, %v131
    %v177 = vpack.c.b16 %v135, %v132
    %v178 = vpack.c.b16 %v139, %v136
    %v179 = vpack.c.b16 %v140, %v137
    %v180 = vpack.c.b16 %v141, %v138
    %v181 = vpack.c.b16 %v145, %v142
    %v182 = vpack.c.b16 %v146, %v143
    %v183 = vpack.c.b16 %v147, %v144
    %v184 = vpack.c.b16 %v151, %v148
    %v185 = vpack.c.b16 %v152, %v149
    %v186 = vpack.c.b16 %v153, %v150
    %v187 = vpack.c.b16 %v157, %v154
    %v188 = vpack.c.b16 %v158, %v155
    %v189 = vpack.c.b16 %v159, %v156
    %v190 = vpack.c.b16 %v163, %v160
    %v191 = vpack.c.b16 %v164, %v161
    %v192 = vpack.c.b16 %v165, %v162
    %v193 = vpack.c.b16 %v169, %v166
    %v194 = vpack.c.b16 %v170, %v167
    %v195 = vpack.c.b16 %v171, %v168
    %220 = vmatprep.subr.bf16.mxu0 %v173
    %221 = vmatpush1.bf16.msra.mxu0 %v172
    %222 = vmatprep.subr.bf16.mxu0 %v176
    %223 = vmatpush1.bf16.msra.mxu0 %v175
    %224 = vmatprep.subr.bf16.mxu0 %v179
    %225 = vmatpush1.bf16.msra.mxu0 %v178
    %226 = vmatprep.subr.bf16.mxu0 %v182
    %227 = vmatpush1.bf16.msra.mxu0 %v181
    %228 = vmatprep.subr.bf16.mxu0 %v185
    %229 = vmatpush1.bf16.msra.mxu0 %v184
    %230 = vmatprep.subr.bf16.mxu0 %v188
    %231 = vmatpush1.bf16.msra.mxu0 %v187
    %232 = vmatprep.subr.bf16.mxu0 %v191
    %233 = vmatpush1.bf16.msra.mxu0 %v190
    %234 = vmatprep.subr.bf16.mxu0 %v194
    %235 = vmatpush1.bf16.msra.mxu0 %v193
    %236 = vmatprep.subr.bf16.mxu0 0
    %237 = vmatpush1.bf16.msra.mxu0 0
    %238 = vmatprep.subr.bf16.mxu0 0
    %239 = vmatpush1.bf16.msra.mxu0 0
    %240 = vmatprep.subr.bf16.mxu0 0
    %241 = vmatpush1.bf16.msra.mxu0 0
    %242 = vmatprep.subr.bf16.mxu0 0
    %243 = vmatpush1.bf16.msra.mxu0 0
    %244 = vmatprep.subr.bf16.mxu0 0
    %245 = vmatpush1.bf16.msra.mxu0 0
    %246 = vmatprep.subr.bf16.mxu0 0
    %247 = vmatpush1.bf16.msra.mxu0 0
    %248 = vmatprep.subr.bf16.mxu0 0
    %249 = vmatpush1.bf16.msra.mxu0 0
    %250 = vmatprep.subr.bf16.mxu0 0
    %251 = vmatpush1.bf16.msra.mxu0 0
    %252 = vmatprep.mubr.bf16.mxu0 0
    %253 = vmatmul.mubr.bf16.gmra.mrb[0].mxu0 %v42
    %v254 = vpop.f32.mrb[0].mxu0
    %v255 = vadd.f32 %v80, %v254
    %v256 = vpop.f32.mrb[0].mxu0
    %v257 = vadd.f32 %v84, %v256
    %v258 = vpop.f32.mrb[0].mxu0
    %v259 = vpop.f32.mrb[0].mxu0
    %260 = vdwg.mxu0
    %261 = vmatprep.subr.bf16.mxu0 0
    %262 = vmatpush1.bf16.msra.mxu0 %v174
    %263 = vmatprep.subr.bf16.mxu0 0
    %264 = vmatpush1.bf16.msra.mxu0 %v177
    %265 = vmatprep.subr.bf16.mxu0 0
    %266 = vmatpush1.bf16.msra.mxu0 %v180
    %267 = vmatprep.subr.bf16.mxu0 0
    %268 = vmatpush1.bf16.msra.mxu0 %v183
    %269 = vmatprep.subr.bf16.mxu0 0
    %270 = vmatpush1.bf16.msra.mxu0 %v186
    %271 = vmatprep.subr.bf16.mxu0 0
    %272 = vmatpush1.bf16.msra.mxu0 %v189
    %273 = vmatprep.subr.bf16.mxu0 0
    %274 = vmatpush1.bf16.msra.mxu0 %v192
    %275 = vmatprep.subr.bf16.mxu0 0
    %276 = vmatpush1.bf16.msra.mxu0 %v195
    %277 = vmatprep.subr.bf16.mxu0 0
    %278 = vmatpush1.bf16.msra.mxu0 0
    %279 = vmatprep.subr.bf16.mxu0 0
    %280 = vmatpush1.bf16.msra.mxu0 0
    %281 = vmatprep.subr.bf16.mxu0 0
    %282 = vmatpush1.bf16.msra.mxu0 0
    %283 = vmatprep.subr.bf16.mxu0 0
    %284 = vmatpush1.bf16.msra.mxu0 0
    %285 = vmatprep.subr.bf16.mxu0 0
    %286 = vmatpush1.bf16.msra.mxu0 0
    %287 = vmatprep.subr.bf16.mxu0 0
    %288 = vmatpush1.bf16.msra.mxu0 0
    %289 = vmatprep.subr.bf16.mxu0 0
    %290 = vmatpush1.bf16.msra.mxu0 0
    %291 = vmatprep.subr.bf16.mxu0 0
    %292 = vmatpush1.bf16.msra.mxu0 0
    %293 = vmatprep.mubr.bf16.mxu0 0
    %294 = vmatmul.mubr.bf16.gmra.mrb[0].mxu0 %v42
    %v295 = vpop.f32.mrb[0].mxu0
    %v296 = vadd.f32 %v88, %v295
    %v297 = vpop.f32.mrb[0].mxu0
    %v298 = vpop.f32.mrb[0].mxu0
    %v299 = vpop.f32.mrb[0].mxu0
    %300 = vdwg.mxu0
    %301 = vst [vmem:[#allocation7] sm:$0xff] %v255
    %302 = vst [vmem:[#allocation7 + $0x8] sm:$0xff] %v257
    %303 = vst [vmem:[#allocation7 + $0x10] sm:$0xff] %v296
    // Predicated region
    $region22: #{tpu_custom_call.1} parent=1 // pred_check
      _
    $region23: #{tpu_custom_call.1} parent=1 // pred_check_branch
      %305 = sbr.rel (0) target = $region25
    $region24: #{tpu_custom_call.1} parent=1 // pred_region
      %s307 = ssub.s32 384, 384
      %308 = vsyncadd [#allocation4], %s307
      %s310 = sshll.u32 [#allocation7], 4
      %s311 = int_to_ptr.vmem [resolvable:$true] %s310
      %313 = dma.vmem_to_hbm [thread:$0]  %s311, 384, %s3, [#allocation4]
    $region25: #{tpu_custom_call.1} parent=1 // pred_fallthru
      _
    // Predicated region
    $region26: #{tpu_custom_call.1} parent=1 // pred_check
      _
    $region27: #{tpu_custom_call.1} parent=1 // pred_check_branch
      %315 = sbr.rel (0) target = $region29
    $region28: #{tpu_custom_call.1} parent=1 // pred_region
      %316 = dma.done [#allocation4], 384
    $region29: #{tpu_custom_call.1} parent=1 // pred_fallthru
      _
    %317 = vsyncpa [#allocation3], 1
    %318 = vsyncpa [#allocation6], 1
    %319 = vsyncpa [#allocation4], 1

</llo_original>
